<compile_context>
chip_gen: v7x
topology: tpu7x:2x2x1
jax: 0.10.0
libtpu: 0.0.40
codegen_flags: <defaults>
</compile_context>

<pallas_src>
import jax
import jax.numpy as jnp
import numpy as np
from jax.experimental import pallas as pl
from jax.experimental.pallas import tpu as pltpu


def cnn_kernel(x_ref, w12_ref, b12_ref, w3_ref, b3_ref, wfc_ref, bfc_ref, o_ref):
    """Tokens on the lane axis throughout (lane-dense loads and stores).

    x_ref   : (2, TN)     input channels on sublanes, tokens on lanes
    w12_ref : (256, 2)    folded conv1->conv2 weight, (out, in)
    b12_ref : (256, 1)    folded bias
    w3_ref  : (128, 256)  conv3 weight, (out, in)
    b3_ref  : (128, 1)
    wfc_ref : (1, 128)    fc weight
    bfc_ref : (1, 1)
    o_ref   : (1, TN)     lane-dense output
    """
    x = x_ref[...]                                                   # (2, TN)

    # Folded conv1+conv2 (contraction K=2): two VPU broadcast FMAs, no MXU.
    h = (w12_ref[:, 0:1] * x[0:1, :]
         + w12_ref[:, 1:2] * x[1:2, :]
         + b12_ref[...])                                             # (256, TN)

    # conv3 on the MXU: (128, 256) @ (256, TN), f32 accumulation.
    h = jnp.dot(w3_ref[...], h,
                preferred_element_type=jnp.float32) + b3_ref[...]    # (128, TN)

    # fc (128 -> 1): (1, 128) @ (128, TN) -> lane-dense (1, TN) store.
    o_ref[...] = (jnp.dot(wfc_ref[...], h,
                          preferred_element_type=jnp.float32)
                  + bfc_ref[...])                                    # (1, TN)


def _round_up(a, m):
    return (a + m - 1) // m * m


def fold_params(params):
    """One-time (param-build) fold + relayout for the kernel.

    conv1 is absorbed into conv2 (exact: the network has no nonlinearities),
    and all weights are transposed to (out, in) so tokens stay on lanes.
    """
    w1, b1, w2, b2, w3, b3, wfc, bfc = params
    w12 = w1 @ w2                            # (2, 256)
    b12 = b1 @ w2 + b2                       # (1, 256)
    return (jnp.asarray(w12.T),              # (256, 2)
            jnp.asarray(b12.T),              # (256, 1)
            jnp.asarray(w3.T),               # (128, 256)
            jnp.asarray(b3.T),               # (128, 1)
            jnp.asarray(wfc),                # (1, 128)
            jnp.asarray(bfc))                # (1, 1)


def cnn_forward(x, folded_params, *, max_block_tokens=4096):
    """x: (B, L, 2) float32 -> (B, 2, 1) float32 (== PyTorch y_pred[:, -2:])."""
    B, L, C_in = x.shape
    assert C_in == 2
    w12, b12, w3, b3, wfc, bfc = folded_params

    # Slice FIRST (every layer is pointwise), then put tokens on the lane axis.
    x_tok = x[:, -2:, :].reshape(B * 2, C_in).T                      # (2, 2B)
    N = x_tok.shape[1]

    # Lane-dense tile: TN is a multiple of 128.  Large tiles amortize the
    # ~0.35 us grid-step overhead; but if the batch spans >=2 lane tiles, keep
    # >=2 grid steps so v7x's two TensorCores both get work.
    N_128 = _round_up(N, 128)
    TN = min(max_block_tokens, N_128)
    if TN == N_128 and N_128 >= 256:
        TN = _round_up(N_128 // 2, 128)
    N_pad = _round_up(N, TN)
    if N_pad != N:
        x_tok = jnp.pad(x_tok, ((0, 0), (0, N_pad - N)))

    grid = (N_pad // TN,)
    const = lambda i: (0, 0)   # weights/biases stay VMEM-resident across steps

    y_flat = pl.pallas_call(
        cnn_kernel,
        out_shape=jax.ShapeDtypeStruct((1, N_pad), jnp.float32),
        grid=grid,
        in_specs=[
            pl.BlockSpec((2, TN), lambda i: (0, i)),   # x tokens (lane-dense)
            pl.BlockSpec((256, 2), const),             # w12 (folded conv1+2)
            pl.BlockSpec((256, 1), const),             # b12
            pl.BlockSpec((128, 256), const),           # w3
            pl.BlockSpec((128, 1), const),             # b3
            pl.BlockSpec((1, 128), const),             # wfc
            pl.BlockSpec((1, 1), const),               # bfc
        ],
        out_specs=pl.BlockSpec((1, TN), lambda i: (0, i)),            # lane-dense
        compiler_params=pltpu.CompilerParams(
            dimension_semantics=("parallel",)),        # megacore on v7x
    )(x_tok, w12, b12, w3, b3, wfc, bfc)

    return y_flat[0, :N].reshape(B, 2, 1)


def make_params(key):
    """Deterministic synthetic parameters with the module's shapes.

    PyTorch shapes: conv1 w (128,2,1) b (128,), conv2 w (256,128,1) b (256,),
    conv3 w (128,256,1) b (128,), fc w (1,128) b (1,).  Stored here as (in,out)
    matrices / (1,out) biases; the fc weight as (1,128), bias (1,1).
    """
    ks = jax.random.split(key, 8)

    def u(k, shape, fan_in):
        bound = 1.0 / np.sqrt(fan_in)
        return jax.random.uniform(k, shape, jnp.float32, -bound, bound)

    w1 = u(ks[0], (2, 128), 2)
    b1 = u(ks[1], (1, 128), 2)
    w2 = u(ks[2], (128, 256), 128)
    b2 = u(ks[3], (1, 256), 128)
    w3 = u(ks[4], (256, 128), 256)
    b3 = u(ks[5], (1, 128), 256)
    wfc = u(ks[6], (1, 128), 128)
    bfc = u(ks[7], (1, 1), 128)
    return (w1, b1, w2, b2, w3, b3, wfc, bfc)


def cnn_reference(x, params):
    """Pure-JAX reference mirroring the PyTorch forward exactly
    (full-sequence, unfolded weights, slice last)."""
    w1, b1, w2, b2, w3, b3, wfc, bfc = params
    h = x @ w1 + b1            # conv1 (k=1) on channel axis
    h = h @ w2 + b2            # conv2
    h = h @ w3 + b3            # conv3
    y = h @ wfc.T + bfc        # fc
    return y[:, -2:]


if __name__ == "__main__":
    key = jax.random.PRNGKey(0)
    k_x, k_p, k_x2 = jax.random.split(key, 3)
    params = make_params(k_p)
    folded = fold_params(params)

    # Small shape (single grid step).
    B, L = 2, 16
    x = jax.random.normal(k_x, (B, L, 2), dtype=jnp.float32)
    y = jax.block_until_ready(cnn_forward(x, folded))
    y_ref = cnn_reference(x, params)
    assert y.shape == (B, 2, 1)
    assert np.allclose(np.asarray(y), np.asarray(y_ref), atol=1e-3, rtol=1e-3)

    # Slightly larger batch to exercise the >=2 grid-step (megacore) + padding
    # path (N = 160 tokens -> two 128-token lane tiles).
    B2, L2 = 80, 8
    x2 = jax.random.normal(k_x2, (B2, L2, 2), dtype=jnp.float32)
    y2 = jax.block_until_ready(cnn_forward(x2, folded))
    y2_ref = cnn_reference(x2, params)
    assert y2.shape == (B2, 2, 1)
    assert np.allclose(np.asarray(y2), np.asarray(y2_ref), atol=1e-3, rtol=1e-3)

    print("KERNEL_OK")
</pallas_src>

<mosaic_0001>
module attributes {stable_mosaic.version = 11 : i64} {
  func.func @cnn_kernel(%arg0: i32, %arg1: memref<2x128xf32, #tpu.memory_space<vmem>>, %arg2: memref<256x2xf32, #tpu.memory_space<vmem>>, %arg3: memref<256x1xf32, #tpu.memory_space<vmem>>, %arg4: memref<128x256xf32, #tpu.memory_space<vmem>>, %arg5: memref<128x1xf32, #tpu.memory_space<vmem>>, %arg6: memref<1x128xf32, #tpu.memory_space<vmem>>, %arg7: memref<1x1xf32, #tpu.memory_space<vmem>>, %arg8: memref<1x128xf32, #tpu.memory_space<vmem>>) attributes {dimension_semantics = [#tpu.dimension_semantics<parallel>], iteration_bounds = array<i64: 1>, scalar_prefetch = 0 : i64, scratch_operands = 0 : i64, tpu.core_type = #tpu.core_type<tc>, window_params = [{transform_indices = @transform_0, window_bounds = array<i64: 2, 128>}, {pipeline_mode = #tpu.pipeline_mode<synchronous>, transform_indices = @transform_1, window_bounds = array<i64: 256, 2>}, {pipeline_mode = #tpu.pipeline_mode<synchronous>, transform_indices = @transform_2, window_bounds = array<i64: 256, 1>}, {pipeline_mode = #tpu.pipeline_mode<synchronous>, transform_indices = @transform_3, window_bounds = array<i64: 128, 256>}, {pipeline_mode = #tpu.pipeline_mode<synchronous>, transform_indices = @transform_4, window_bounds = array<i64: 128, 1>}, {pipeline_mode = #tpu.pipeline_mode<synchronous>, transform_indices = @transform_5, window_bounds = array<i64: 1, 128>}, {pipeline_mode = #tpu.pipeline_mode<synchronous>, transform_indices = @transform_6, window_bounds = array<i64: 1, 1>}, {transform_indices = @transform_7, window_bounds = array<i64: 1, 128>}]} {
    %c0 = arith.constant 0 : index
    %c0_0 = arith.constant 0 : index
    %0 = vector.load %arg1[%c0, %c0_0] : memref<2x128xf32, #tpu.memory_space<vmem>>, vector<2x128xf32>
    %c0_1 = arith.constant 0 : index
    %c0_2 = arith.constant 0 : index
    %1 = vector.load %arg2[%c0_1, %c0_2] : memref<256x2xf32, #tpu.memory_space<vmem>>, vector<256x1xf32>
    %2 = vector.extract_strided_slice %0 {offsets = [0, 0], sizes = [1, 128], strides = [1, 1]} : vector<2x128xf32> to vector<1x128xf32>
    %3 = vector.broadcast %1 : vector<256x1xf32> to vector<256x128xf32>
    %4 = vector.broadcast %2 : vector<1x128xf32> to vector<256x128xf32>
    %5 = arith.mulf %3, %4 : vector<256x128xf32>
    %c0_3 = arith.constant 0 : index
    %c1 = arith.constant 1 : index
    %6 = vector.load %arg2[%c0_3, %c1] : memref<256x2xf32, #tpu.memory_space<vmem>>, vector<256x1xf32>
    %7 = vector.extract_strided_slice %0 {offsets = [1, 0], sizes = [1, 128], strides = [1, 1]} : vector<2x128xf32> to vector<1x128xf32>
    %8 = vector.broadcast %6 : vector<256x1xf32> to vector<256x128xf32>
    %9 = vector.broadcast %7 : vector<1x128xf32> to vector<256x128xf32>
    %10 = arith.mulf %8, %9 : vector<256x128xf32>
    %11 = arith.addf %5, %10 : vector<256x128xf32>
    %c0_4 = arith.constant 0 : index
    %c0_5 = arith.constant 0 : index
    %12 = vector.load %arg3[%c0_4, %c0_5] : memref<256x1xf32, #tpu.memory_space<vmem>>, vector<256x1xf32>
    %13 = vector.broadcast %12 : vector<256x1xf32> to vector<256x128xf32>
    %14 = arith.addf %11, %13 : vector<256x128xf32>
    %c0_6 = arith.constant 0 : index
    %c0_7 = arith.constant 0 : index
    %15 = vector.load %arg4[%c0_6, %c0_7] : memref<128x256xf32, #tpu.memory_space<vmem>>, vector<128x256xf32>
    %cst = arith.constant dense<0.000000e+00> : vector<128x128xf32>
    %16 = tpu.matmul %15, %14, %cst {dimension_numbers = #tpu.dot_dimension_numbers<[1], [0], [0], [1], [0, 0, 1, 1], [], []>} : vector<128x256xf32>, vector<256x128xf32>, vector<128x128xf32> -> vector<128x128xf32>
    %c0_8 = arith.constant 0 : index
    %c0_9 = arith.constant 0 : index
    %17 = vector.load %arg5[%c0_8, %c0_9] : memref<128x1xf32, #tpu.memory_space<vmem>>, vector<128x1xf32>
    %18 = vector.broadcast %17 : vector<128x1xf32> to vector<128x128xf32>
    %19 = arith.addf %16, %18 : vector<128x128xf32>
    %c0_10 = arith.constant 0 : index
    %c0_11 = arith.constant 0 : index
    %20 = vector.load %arg6[%c0_10, %c0_11] : memref<1x128xf32, #tpu.memory_space<vmem>>, vector<1x128xf32>
    %cst_12 = arith.constant dense<0.000000e+00> : vector<1x128xf32>
    %21 = tpu.matmul %20, %19, %cst_12 {dimension_numbers = #tpu.dot_dimension_numbers<[1], [0], [0], [1], [0, 0, 1, 1], [], []>} : vector<1x128xf32>, vector<128x128xf32>, vector<1x128xf32> -> vector<1x128xf32>
    %c0_13 = arith.constant 0 : index
    %c0_14 = arith.constant 0 : index
    %22 = vector.load %arg7[%c0_13, %c0_14] : memref<1x1xf32, #tpu.memory_space<vmem>>, vector<1x1xf32>
    %23 = vector.broadcast %22 : vector<1x1xf32> to vector<1x128xf32>
    %24 = arith.addf %21, %23 : vector<1x128xf32>
    %c0_15 = arith.constant 0 : index
    %c0_16 = arith.constant 0 : index
    %25 = vector.load %arg8[%c0_15, %c0_16] : memref<1x128xf32, #tpu.memory_space<vmem>>, vector<1x128xf32>
    tpu.vector_store %arg8[%c0_15, %c0_16], %24 {strides = array<i32>} : memref<1x128xf32, #tpu.memory_space<vmem>>, vector<1x128xf32>,
    return
  }
  func.func @transform_0(%arg0: i32) -> (i32, i32) {
    %c0_i32 = arith.constant 0 : i32
    %c0_i32_0 = arith.constant 0 : i32
    return %c0_i32, %arg0 : i32, i32
  }
  func.func @transform_1(%arg0: i32) -> (i32, i32) {
    %c0_i32 = arith.constant 0 : i32
    %c0_i32_0 = arith.constant 0 : i32
    %c0_i32_1 = arith.constant 0 : i32
    return %c0_i32, %c0_i32_0 : i32, i32
  }
  func.func @transform_2(%arg0: i32) -> (i32, i32) {
    %c0_i32 = arith.constant 0 : i32
    %c0_i32_0 = arith.constant 0 : i32
    %c0_i32_1 = arith.constant 0 : i32
    return %c0_i32, %c0_i32_0 : i32, i32
  }
  func.func @transform_3(%arg0: i32) -> (i32, i32) {
    %c0_i32 = arith.constant 0 : i32
    %c0_i32_0 = arith.constant 0 : i32
    %c0_i32_1 = arith.constant 0 : i32
    return %c0_i32, %c0_i32_0 : i32, i32
  }
  func.func @transform_4(%arg0: i32) -> (i32, i32) {
    %c0_i32 = arith.constant 0 : i32
    %c0_i32_0 = arith.constant 0 : i32
    %c0_i32_1 = arith.constant 0 : i32
    return %c0_i32, %c0_i32_0 : i32, i32
  }
  func.func @transform_5(%arg0: i32) -> (i32, i32) {
    %c0_i32 = arith.constant 0 : i32
    %c0_i32_0 = arith.constant 0 : i32
    %c0_i32_1 = arith.constant 0 : i32
    return %c0_i32, %c0_i32_0 : i32, i32
  }
  func.func @transform_6(%arg0: i32) -> (i32, i32) {
    %c0_i32 = arith.constant 0 : i32
    %c0_i32_0 = arith.constant 0 : i32
    %c0_i32_1 = arith.constant 0 : i32
    return %c0_i32, %c0_i32_0 : i32, i32
  }
  func.func @transform_7(%arg0: i32) -> (i32, i32) {
    %c0_i32 = arith.constant 0 : i32
    %c0_i32_0 = arith.constant 0 : i32
    return %c0_i32, %arg0 : i32, i32
  }
}

</mosaic_0001>

<llo_original>
// kernel: tpu_custom_call.1
$region0: #{tpu_custom_call.1}
  #allocation0 [shape = 'u32[]', space=smem, size = 0x4, offset = 0x4, fixed_abs, tag = 'smem constant byte address 0x4 - core index']
  #allocation1 [shape = 'u32[144,128]{1,0:T(1,128)}', space=vmem, size = 0x12000, scoped, tag = 'internal scratch']
  #allocation2 [shape = 'f32[1,1]{1,0:T(1,128)S(1)}', space=vmem, size = 0x200, scoped, tag = 'scoped memory for tpu_custom_call.1']
  %s0 = inlined_call_operand.vmem [shape: f32[2,128], index: 0, kind: input, shape index: {}]
  %s1 = inlined_call_operand.vmem [shape: f32[256,2], index: 1, kind: input, shape index: {}]
  %s2 = inlined_call_operand.vmem [shape: f32[256,1], index: 2, kind: input, shape index: {}]
  %s3 = inlined_call_operand.vmem [shape: f32[128,256], index: 3, kind: input, shape index: {}]
  %s4 = inlined_call_operand.vmem [shape: f32[128,1], index: 4, kind: input, shape index: {}]
  %s5 = inlined_call_operand.vmem [shape: f32[1,128], index: 5, kind: input, shape index: {}]
  %s6 = inlined_call_operand.<no memory space> [shape: f32[1,1], index: 6, kind: input, shape index: {}]
  %s7 = inlined_call_operand.hbm [shape: f32[1,128], index: 7, kind: output, shape index: {}]
  %s8 = sld [smem:[#allocation0]]
  $region38: #{tpu_custom_call.1} parent=0
    _
  %s10 = ssub.s32 1, %s8
  %s11 = scalar_select 0, %s10, %s8
  %v12 = vstv %s6
  %13 = vst [vmem:[#allocation2] sm:$0x1] %v12
  $region1: #{tpu_custom_call.1} parent=0
    #allocation3 [shape = 'u8[512]{0}', space=vmem, size = 0x400, scoped, tag = 'output window, operand 0, single buffered']
    #allocation4 [shape = 's32[1]{0}', space=sflag, size = 0x4, scoped, tag = 'scoped memory for tpu_custom_call.1']
    %14 = vsyncpa [#allocation4], 0
    // Predicated region
    $region2: #{tpu_custom_call.1} parent=1 // pred_check
      _
    $region3: #{tpu_custom_call.1} parent=1 // pred_check_branch
      %16 = sbr.rel (0) target = $region5
    $region4: #{tpu_custom_call.1} parent=1 // pred_region
      _
    $region5: #{tpu_custom_call.1} parent=1 // pred_fallthru
      _
    // Predicated region
    $region6: #{tpu_custom_call.1} parent=1 // pred_check
      _
    $region7: #{tpu_custom_call.1} parent=1 // pred_check_branch
      %18 = sbr.rel (0) target = $region9
    $region8: #{tpu_custom_call.1} parent=1 // pred_region
      _
    $region9: #{tpu_custom_call.1} parent=1 // pred_fallthru
      _
    // Predicated region
    $region10: #{tpu_custom_call.1} parent=1 // pred_check
      _
    $region11: #{tpu_custom_call.1} parent=1 // pred_check_branch
      %20 = sbr.rel (0) target = $region13
    $region12: #{tpu_custom_call.1} parent=1 // pred_region
      _
    $region13: #{tpu_custom_call.1} parent=1 // pred_fallthru
      _
    // Predicated region
    $region14: #{tpu_custom_call.1} parent=1 // pred_check
      _
    $region15: #{tpu_custom_call.1} parent=1 // pred_check_branch
      %22 = sbr.rel (0) target = $region17
    $region16: #{tpu_custom_call.1} parent=1 // pred_region
      _
    $region17: #{tpu_custom_call.1} parent=1 // pred_fallthru
      _
    // Predicated region
    $region18: #{tpu_custom_call.1} parent=1 // pred_check
      _
    $region19: #{tpu_custom_call.1} parent=1 // pred_check_branch
      %24 = sbr.rel (0) target = $region21
    $region20: #{tpu_custom_call.1} parent=1 // pred_region
      _
    $region21: #{tpu_custom_call.1} parent=1 // pred_fallthru
      _
    // Predicated region
    $region22: #{tpu_custom_call.1} parent=1 // pred_check
      _
    $region23: #{tpu_custom_call.1} parent=1 // pred_check_branch
      %26 = sbr.rel (0) target = $region25
    $region24: #{tpu_custom_call.1} parent=1 // pred_region
      _
    $region25: #{tpu_custom_call.1} parent=1 // pred_fallthru
      _
    // Predicated region
    $region26: #{tpu_custom_call.1} parent=1 // pred_check
      _
    $region27: #{tpu_custom_call.1} parent=1 // pred_check_branch
      %28 = sbr.rel (0) target = $region29
    $region28: #{tpu_custom_call.1} parent=1 // pred_region
      _
    $region29: #{tpu_custom_call.1} parent=1 // pred_fallthru
      _
    %v29 = vld [vmem:[%s0] sm:$0x3]
    %v30 = vld [vmem:[%s1] sm:$0xff]
    %v31 = vld [vmem:[%s1 + $0x8] sm:$0xff]
    %v32 = vld [vmem:[%s1 + $0x10] sm:$0xff]
    %v33 = vld [vmem:[%s1 + $0x18] sm:$0xff]
    %v34 = vld [vmem:[%s1 + $0x20] sm:$0xff]
    %v35 = vld [vmem:[%s1 + $0x28] sm:$0xff]
    %v36 = vld [vmem:[%s1 + $0x30] sm:$0xff]
    %v37 = vld [vmem:[%s1 + $0x38] sm:$0xff]
    %v38 = vld [vmem:[%s1 + $0x40] sm:$0xff]
    %v39 = vld [vmem:[%s1 + $0x48] sm:$0xff]
    %v40 = vld [vmem:[%s1 + $0x50] sm:$0xff]
    %v41 = vld [vmem:[%s1 + $0x58] sm:$0xff]
    %v42 = vld [vmem:[%s1 + $0x60] sm:$0xff]
    %v43 = vld [vmem:[%s1 + $0x68] sm:$0xff]
    %v44 = vld [vmem:[%s1 + $0x70] sm:$0xff]
    %v45 = vld [vmem:[%s1 + $0x78] sm:$0xff]
    %v46 = vld [vmem:[%s1 + $0x80] sm:$0xff]
    %v47 = vld [vmem:[%s1 + $0x88] sm:$0xff]
    %v48 = vld [vmem:[%s1 + $0x90] sm:$0xff]
    %v49 = vld [vmem:[%s1 + $0x98] sm:$0xff]
    %v50 = vld [vmem:[%s1 + $0xa0] sm:$0xff]
    %v51 = vld [vmem:[%s1 + $0xa8] sm:$0xff]
    %v52 = vld [vmem:[%s1 + $0xb0] sm:$0xff]
    %v53 = vld [vmem:[%s1 + $0xb8] sm:$0xff]
    %v54 = vld [vmem:[%s1 + $0xc0] sm:$0xff]
    %v55 = vld [vmem:[%s1 + $0xc8] sm:$0xff]
    %v56 = vld [vmem:[%s1 + $0xd0] sm:$0xff]
    %v57 = vld [vmem:[%s1 + $0xd8] sm:$0xff]
    %v58 = vld [vmem:[%s1 + $0xe0] sm:$0xff]
    %v59 = vld [vmem:[%s1 + $0xe8] sm:$0xff]
    %v60 = vld [vmem:[%s1 + $0xf0] sm:$0xff]
    %v61 = vld [vmem:[%s1 + $0xf8] sm:$0xff]
    %63 = vset.pattern.permute.xlu0 0
    %64 = vperm.xlu0 %63, %v30
    %v65 = vpop.permute.xlu0 %64
    %68 = vset.pattern.permute.xlu0 0
    %69 = vperm.xlu0 %68, %v31
    %v70 = vpop.permute.xlu0 %69
    %73 = vset.pattern.permute.xlu0 0
    %74 = vperm.xlu0 %73, %v32
    %v75 = vpop.permute.xlu0 %74
    %78 = vset.pattern.permute.xlu0 0
    %79 = vperm.xlu0 %78, %v33
    %v80 = vpop.permute.xlu0 %79
    %83 = vset.pattern.permute.xlu0 0
    %84 = vperm.xlu0 %83, %v34
    %v85 = vpop.permute.xlu0 %84
    %88 = vset.pattern.permute.xlu0 0
    %89 = vperm.xlu0 %88, %v35
    %v90 = vpop.permute.xlu0 %89
    %93 = vset.pattern.permute.xlu0 0
    %94 = vperm.xlu0 %93, %v36
    %v95 = vpop.permute.xlu0 %94
    %98 = vset.pattern.permute.xlu0 0
    %99 = vperm.xlu0 %98, %v37
    %v100 = vpop.permute.xlu0 %99
    %103 = vset.pattern.permute.xlu0 0
    %104 = vperm.xlu0 %103, %v38
    %v105 = vpop.permute.xlu0 %104
    %108 = vset.pattern.permute.xlu0 0
    %109 = vperm.xlu0 %108, %v39
    %v110 = vpop.permute.xlu0 %109
    %113 = vset.pattern.permute.xlu0 0
    %114 = vperm.xlu0 %113, %v40
    %v115 = vpop.permute.xlu0 %114
    %118 = vset.pattern.permute.xlu0 0
    %119 = vperm.xlu0 %118, %v41
    %v120 = vpop.permute.xlu0 %119
    %123 = vset.pattern.permute.xlu0 0
    %124 = vperm.xlu0 %123, %v42
    %v125 = vpop.permute.xlu0 %124
    %128 = vset.pattern.permute.xlu0 0
    %129 = vperm.xlu0 %128, %v43
    %v130 = vpop.permute.xlu0 %129
    %133 = vset.pattern.permute.xlu0 0
    %134 = vperm.xlu0 %133, %v44
    %v135 = vpop.permute.xlu0 %134
    %138 = vset.pattern.permute.xlu0 0
    %139 = vperm.xlu0 %138, %v45
    %v140 = vpop.permute.xlu0 %139
    %143 = vset.pattern.permute.xlu0 0
    %144 = vperm.xlu0 %143, %v46
    %v145 = vpop.permute.xlu0 %144
    %148 = vset.pattern.permute.xlu0 0
    %149 = vperm.xlu0 %148, %v47
    %v150 = vpop.permute.xlu0 %149
    %153 = vset.pattern.permute.xlu0 0
    %154 = vperm.xlu0 %153, %v48
    %v155 = vpop.permute.xlu0 %154
    %158 = vset.pattern.permute.xlu0 0
    %159 = vperm.xlu0 %158, %v49
    %v160 = vpop.permute.xlu0 %159
    %163 = vset.pattern.permute.xlu0 0
    %164 = vperm.xlu0 %163, %v50
    %v165 = vpop.permute.xlu0 %164
    %168 = vset.pattern.permute.xlu0 0
    %169 = vperm.xlu0 %168, %v51
    %v170 = vpop.permute.xlu0 %169
    %173 = vset.pattern.permute.xlu0 0
    %174 = vperm.xlu0 %173, %v52
    %v175 = vpop.permute.xlu0 %174
    %178 = vset.pattern.permute.xlu0 0
    %179 = vperm.xlu0 %178, %v53
    %v180 = vpop.permute.xlu0 %179
    %183 = vset.pattern.permute.xlu0 0
    %184 = vperm.xlu0 %183, %v54
    %v185 = vpop.permute.xlu0 %184
    %188 = vset.pattern.permute.xlu0 0
    %189 = vperm.xlu0 %188, %v55
    %v190 = vpop.permute.xlu0 %189
    %193 = vset.pattern.permute.xlu0 0
    %194 = vperm.xlu0 %193, %v56
    %v195 = vpop.permute.xlu0 %194
    %198 = vset.pattern.permute.xlu0 0
    %199 = vperm.xlu0 %198, %v57
    %v200 = vpop.permute.xlu0 %199
    %203 = vset.pattern.permute.xlu0 0
    %204 = vperm.xlu0 %203, %v58
    %v205 = vpop.permute.xlu0 %204
    %208 = vset.pattern.permute.xlu0 0
    %209 = vperm.xlu0 %208, %v59
    %v210 = vpop.permute.xlu0 %209
    %213 = vset.pattern.permute.xlu0 0
    %214 = vperm.xlu0 %213, %v60
    %v215 = vpop.permute.xlu0 %214
    %218 = vset.pattern.permute.xlu0 0
    %219 = vperm.xlu0 %218, %v61
    %v220 = vpop.permute.xlu0 %219
    %v222 = vlaneseq
    %v223 = vshrl.u32 %v222, 7
    %v224 = vsub.s32 0, %v223
    %v225 = vrot.slane %v29, %v224
    %v226 = vmul.f32 %v65, %v225
    %v227 = vmul.f32 %v70, %v225
    %v228 = vmul.f32 %v75, %v225
    %v229 = vmul.f32 %v80, %v225
    %v230 = vmul.f32 %v85, %v225
    %v231 = vmul.f32 %v90, %v225
    %v232 = vmul.f32 %v95, %v225
    %v233 = vmul.f32 %v100, %v225
    %v234 = vmul.f32 %v105, %v225
    %v235 = vmul.f32 %v110, %v225
    %v236 = vmul.f32 %v115, %v225
    %v237 = vmul.f32 %v120, %v225
    %v238 = vmul.f32 %v125, %v225
    %v239 = vmul.f32 %v130, %v225
    %v240 = vmul.f32 %v135, %v225
    %v241 = vmul.f32 %v140, %v225
    %v242 = vmul.f32 %v145, %v225
    %v243 = vmul.f32 %v150, %v225
    %v244 = vmul.f32 %v155, %v225
    %v245 = vmul.f32 %v160, %v225
    %v246 = vmul.f32 %v165, %v225
    %v247 = vmul.f32 %v170, %v225
    %v248 = vmul.f32 %v175, %v225
    %v249 = vmul.f32 %v180, %v225
    %v250 = vmul.f32 %v185, %v225
    %v251 = vmul.f32 %v190, %v225
    %v252 = vmul.f32 %v195, %v225
    %v253 = vmul.f32 %v200, %v225
    %v254 = vmul.f32 %v205, %v225
    %v255 = vmul.f32 %v210, %v225
    %v256 = vmul.f32 %v215, %v225
    %v257 = vmul.f32 %v220, %v225
    %258 = vset.pattern.permute.xlu0 1
    %259 = vperm.xlu0 %258, %v30
    %v260 = vpop.permute.xlu0 %259
    %262 = vset.pattern.permute.xlu0 1
    %263 = vperm.xlu0 %262, %v31
    %v264 = vpop.permute.xlu0 %263
    %266 = vset.pattern.permute.xlu0 1
    %267 = vperm.xlu0 %266, %v32
    %v268 = vpop.permute.xlu0 %267
    %270 = vset.pattern.permute.xlu0 1
    %271 = vperm.xlu0 %270, %v33
    %v272 = vpop.permute.xlu0 %271
    %274 = vset.pattern.permute.xlu0 1
    %275 = vperm.xlu0 %274, %v34
    %v276 = vpop.permute.xlu0 %275
    %278 = vset.pattern.permute.xlu0 1
    %279 = vperm.xlu0 %278, %v35
    %v280 = vpop.permute.xlu0 %279
    %282 = vset.pattern.permute.xlu0 1
    %283 = vperm.xlu0 %282, %v36
    %v284 = vpop.permute.xlu0 %283
    %286 = vset.pattern.permute.xlu0 1
    %287 = vperm.xlu0 %286, %v37
    %v288 = vpop.permute.xlu0 %287
    %290 = vset.pattern.permute.xlu0 1
    %291 = vperm.xlu0 %290, %v38
    %v292 = vpop.permute.xlu0 %291
    %294 = vset.pattern.permute.xlu0 1
    %295 = vperm.xlu0 %294, %v39
    %v296 = vpop.permute.xlu0 %295
    %298 = vset.pattern.permute.xlu0 1
    %299 = vperm.xlu0 %298, %v40
    %v300 = vpop.permute.xlu0 %299
    %302 = vset.pattern.permute.xlu0 1
    %303 = vperm.xlu0 %302, %v41
    %v304 = vpop.permute.xlu0 %303
    %306 = vset.pattern.permute.xlu0 1
    %307 = vperm.xlu0 %306, %v42
    %v308 = vpop.permute.xlu0 %307
    %310 = vset.pattern.permute.xlu0 1
    %311 = vperm.xlu0 %310, %v43
    %v312 = vpop.permute.xlu0 %311
    %314 = vset.pattern.permute.xlu0 1
    %315 = vperm.xlu0 %314, %v44
    %v316 = vpop.permute.xlu0 %315
    %318 = vset.pattern.permute.xlu0 1
    %319 = vperm.xlu0 %318, %v45
    %v320 = vpop.permute.xlu0 %319
    %322 = vset.pattern.permute.xlu0 1
    %323 = vperm.xlu0 %322, %v46
    %v324 = vpop.permute.xlu0 %323
    %326 = vset.pattern.permute.xlu0 1
    %327 = vperm.xlu0 %326, %v47
    %v328 = vpop.permute.xlu0 %327
    %330 = vset.pattern.permute.xlu0 1
    %331 = vperm.xlu0 %330, %v48
    %v332 = vpop.permute.xlu0 %331
    %334 = vset.pattern.permute.xlu0 1
    %335 = vperm.xlu0 %334, %v49
    %v336 = vpop.permute.xlu0 %335
    %338 = vset.pattern.permute.xlu0 1
    %339 = vperm.xlu0 %338, %v50
    %v340 = vpop.permute.xlu0 %339
    %342 = vset.pattern.permute.xlu0 1
    %343 = vperm.xlu0 %342, %v51
    %v344 = vpop.permute.xlu0 %343
    %346 = vset.pattern.permute.xlu0 1
    %347 = vperm.xlu0 %346, %v52
    %v348 = vpop.permute.xlu0 %347
    %350 = vset.pattern.permute.xlu0 1
    %351 = vperm.xlu0 %350, %v53
    %v352 = vpop.permute.xlu0 %351
    %354 = vset.pattern.permute.xlu0 1
    %355 = vperm.xlu0 %354, %v54
    %v356 = vpop.permute.xlu0 %355
    %358 = vset.pattern.permute.xlu0 1
    %359 = vperm.xlu0 %358, %v55
    %v360 = vpop.permute.xlu0 %359
    %362 = vset.pattern.permute.xlu0 1
    %363 = vperm.xlu0 %362, %v56
    %v364 = vpop.permute.xlu0 %363
    %366 = vset.pattern.permute.xlu0 1
    %367 = vperm.xlu0 %366, %v57
    %v368 = vpop.permute.xlu0 %367
    %370 = vset.pattern.permute.xlu0 1
    %371 = vperm.xlu0 %370, %v58
    %v372 = vpop.permute.xlu0 %371
    %374 = vset.pattern.permute.xlu0 1
    %375 = vperm.xlu0 %374, %v59
    %v376 = vpop.permute.xlu0 %375
    %378 = vset.pattern.permute.xlu0 1
    %379 = vperm.xlu0 %378, %v60
    %v380 = vpop.permute.xlu0 %379
    %382 = vset.pattern.permute.xlu0 1
    %383 = vperm.xlu0 %382, %v61
    %v384 = vpop.permute.xlu0 %383
    %v386 = vlaneseq
    %v387 = vshrl.u32 %v386, 7
    %v388 = vsub.s32 1, %v387
    %v389 = vrot.slane %v29, %v388
    %v390 = vmul.f32 %v260, %v389
    %v391 = vmul.f32 %v264, %v389
    %v392 = vmul.f32 %v268, %v389
    %v393 = vmul.f32 %v272, %v389
    %v394 = vmul.f32 %v276, %v389
    %v395 = vmul.f32 %v280, %v389
    %v396 = vmul.f32 %v284, %v389
    %v397 = vmul.f32 %v288, %v389
    %v398 = vmul.f32 %v292, %v389
    %v399 = vmul.f32 %v296, %v389
    %v400 = vmul.f32 %v300, %v389
    %v401 = vmul.f32 %v304, %v389
    %v402 = vmul.f32 %v308, %v389
    %v403 = vmul.f32 %v312, %v389
    %v404 = vmul.f32 %v316, %v389
    %v405 = vmul.f32 %v320, %v389
    %v406 = vmul.f32 %v324, %v389
    %v407 = vmul.f32 %v328, %v389
    %v408 = vmul.f32 %v332, %v389
    %v409 = vmul.f32 %v336, %v389
    %v410 = vmul.f32 %v340, %v389
    %v411 = vmul.f32 %v344, %v389
    %v412 = vmul.f32 %v348, %v389
    %v413 = vmul.f32 %v352, %v389
    %v414 = vmul.f32 %v356, %v389
    %v415 = vmul.f32 %v360, %v389
    %v416 = vmul.f32 %v364, %v389
    %v417 = vmul.f32 %v368, %v389
    %v418 = vmul.f32 %v372, %v389
    %v419 = vmul.f32 %v376, %v389
    %v420 = vmul.f32 %v380, %v389
    %v421 = vmul.f32 %v384, %v389
    %v422 = vadd.f32 %v226, %v390
    %v423 = vadd.f32 %v227, %v391
    %v424 = vadd.f32 %v228, %v392
    %v425 = vadd.f32 %v229, %v393
    %v426 = vadd.f32 %v230, %v394
    %v427 = vadd.f32 %v231, %v395
    %v428 = vadd.f32 %v232, %v396
    %v429 = vadd.f32 %v233, %v397
    %v430 = vadd.f32 %v234, %v398
    %v431 = vadd.f32 %v235, %v399
    %v432 = vadd.f32 %v236, %v400
    %v433 = vadd.f32 %v237, %v401
    %v434 = vadd.f32 %v238, %v402
    %v435 = vadd.f32 %v239, %v403
    %v436 = vadd.f32 %v240, %v404
    %v437 = vadd.f32 %v241, %v405
    %v438 = vadd.f32 %v242, %v406
    %v439 = vadd.f32 %v243, %v407
    %v440 = vadd.f32 %v244, %v408
    %v441 = vadd.f32 %v245, %v409
    %v442 = vadd.f32 %v246, %v410
    %v443 = vadd.f32 %v247, %v411
    %v444 = vadd.f32 %v248, %v412
    %v445 = vadd.f32 %v249, %v413
    %v446 = vadd.f32 %v250, %v414
    %v447 = vadd.f32 %v251, %v415
    %v448 = vadd.f32 %v252, %v416
    %v449 = vadd.f32 %v253, %v417
    %v450 = vadd.f32 %v254, %v418
    %v451 = vadd.f32 %v255, %v419
    %v452 = vadd.f32 %v256, %v420
    %v453 = vadd.f32 %v257, %v421
    %v454 = vld [vmem:[%s2] sm:$0xff]
    %v455 = vld [vmem:[%s2 + $0x8] sm:$0xff]
    %v456 = vld [vmem:[%s2 + $0x10] sm:$0xff]
    %v457 = vld [vmem:[%s2 + $0x18] sm:$0xff]
    %v458 = vld [vmem:[%s2 + $0x20] sm:$0xff]
    %v459 = vld [vmem:[%s2 + $0x28] sm:$0xff]
    %v460 = vld [vmem:[%s2 + $0x30] sm:$0xff]
    %v461 = vld [vmem:[%s2 + $0x38] sm:$0xff]
    %v462 = vld [vmem:[%s2 + $0x40] sm:$0xff]
    %v463 = vld [vmem:[%s2 + $0x48] sm:$0xff]
    %v464 = vld [vmem:[%s2 + $0x50] sm:$0xff]
    %v465 = vld [vmem:[%s2 + $0x58] sm:$0xff]
    %v466 = vld [vmem:[%s2 + $0x60] sm:$0xff]
    %v467 = vld [vmem:[%s2 + $0x68] sm:$0xff]
    %v468 = vld [vmem:[%s2 + $0x70] sm:$0xff]
    %v469 = vld [vmem:[%s2 + $0x78] sm:$0xff]
    %v470 = vld [vmem:[%s2 + $0x80] sm:$0xff]
    %v471 = vld [vmem:[%s2 + $0x88] sm:$0xff]
    %v472 = vld [vmem:[%s2 + $0x90] sm:$0xff]
    %v473 = vld [vmem:[%s2 + $0x98] sm:$0xff]
    %v474 = vld [vmem:[%s2 + $0xa0] sm:$0xff]
    %v475 = vld [vmem:[%s2 + $0xa8] sm:$0xff]
    %v476 = vld [vmem:[%s2 + $0xb0] sm:$0xff]
    %v477 = vld [vmem:[%s2 + $0xb8] sm:$0xff]
    %v478 = vld [vmem:[%s2 + $0xc0] sm:$0xff]
    %v479 = vld [vmem:[%s2 + $0xc8] sm:$0xff]
    %v480 = vld [vmem:[%s2 + $0xd0] sm:$0xff]
    %v481 = vld [vmem:[%s2 + $0xd8] sm:$0xff]
    %v482 = vld [vmem:[%s2 + $0xe0] sm:$0xff]
    %v483 = vld [vmem:[%s2 + $0xe8] sm:$0xff]
    %v484 = vld [vmem:[%s2 + $0xf0] sm:$0xff]
    %v485 = vld [vmem:[%s2 + $0xf8] sm:$0xff]
    %487 = vset.pattern.permute.xlu0 0
    %488 = vperm.xlu0 %487, %v454
    %v489 = vpop.permute.xlu0 %488
    %492 = vset.pattern.permute.xlu0 0
    %493 = vperm.xlu0 %492, %v455
    %v494 = vpop.permute.xlu0 %493
    %497 = vset.pattern.permute.xlu0 0
    %498 = vperm.xlu0 %497, %v456
    %v499 = vpop.permute.xlu0 %498
    %502 = vset.pattern.permute.xlu0 0
    %503 = vperm.xlu0 %502, %v457
    %v504 = vpop.permute.xlu0 %503
    %507 = vset.pattern.permute.xlu0 0
    %508 = vperm.xlu0 %507, %v458
    %v509 = vpop.permute.xlu0 %508
    %512 = vset.pattern.permute.xlu0 0
    %513 = vperm.xlu0 %512, %v459
    %v514 = vpop.permute.xlu0 %513
    %517 = vset.pattern.permute.xlu0 0
    %518 = vperm.xlu0 %517, %v460
    %v519 = vpop.permute.xlu0 %518
    %522 = vset.pattern.permute.xlu0 0
    %523 = vperm.xlu0 %522, %v461
    %v524 = vpop.permute.xlu0 %523
    %527 = vset.pattern.permute.xlu0 0
    %528 = vperm.xlu0 %527, %v462
    %v529 = vpop.permute.xlu0 %528
    %532 = vset.pattern.permute.xlu0 0
    %533 = vperm.xlu0 %532, %v463
    %v534 = vpop.permute.xlu0 %533
    %537 = vset.pattern.permute.xlu0 0
    %538 = vperm.xlu0 %537, %v464
    %v539 = vpop.permute.xlu0 %538
    %542 = vset.pattern.permute.xlu0 0
    %543 = vperm.xlu0 %542, %v465
    %v544 = vpop.permute.xlu0 %543
    %547 = vset.pattern.permute.xlu0 0
    %548 = vperm.xlu0 %547, %v466
    %v549 = vpop.permute.xlu0 %548
    %552 = vset.pattern.permute.xlu0 0
    %553 = vperm.xlu0 %552, %v467
    %v554 = vpop.permute.xlu0 %553
    %557 = vset.pattern.permute.xlu0 0
    %558 = vperm.xlu0 %557, %v468
    %v559 = vpop.permute.xlu0 %558
    %562 = vset.pattern.permute.xlu0 0
    %563 = vperm.xlu0 %562, %v469
    %v564 = vpop.permute.xlu0 %563
    %567 = vset.pattern.permute.xlu0 0
    %568 = vperm.xlu0 %567, %v470
    %v569 = vpop.permute.xlu0 %568
    %572 = vset.pattern.permute.xlu0 0
    %573 = vperm.xlu0 %572, %v471
    %v574 = vpop.permute.xlu0 %573
    %577 = vset.pattern.permute.xlu0 0
    %578 = vperm.xlu0 %577, %v472
    %v579 = vpop.permute.xlu0 %578
    %582 = vset.pattern.permute.xlu0 0
    %583 = vperm.xlu0 %582, %v473
    %v584 = vpop.permute.xlu0 %583
    %587 = vset.pattern.permute.xlu0 0
    %588 = vperm.xlu0 %587, %v474
    %v589 = vpop.permute.xlu0 %588
    %592 = vset.pattern.permute.xlu0 0
    %593 = vperm.xlu0 %592, %v475
    %v594 = vpop.permute.xlu0 %593
    %597 = vset.pattern.permute.xlu0 0
    %598 = vperm.xlu0 %597, %v476
    %v599 = vpop.permute.xlu0 %598
    %602 = vset.pattern.permute.xlu0 0
    %603 = vperm.xlu0 %602, %v477
    %v604 = vpop.permute.xlu0 %603
    %607 = vset.pattern.permute.xlu0 0
    %608 = vperm.xlu0 %607, %v478
    %v609 = vpop.permute.xlu0 %608
    %612 = vset.pattern.permute.xlu0 0
    %613 = vperm.xlu0 %612, %v479
    %v614 = vpop.permute.xlu0 %613
    %617 = vset.pattern.permute.xlu0 0
    %618 = vperm.xlu0 %617, %v480
    %v619 = vpop.permute.xlu0 %618
    %622 = vset.pattern.permute.xlu0 0
    %623 = vperm.xlu0 %622, %v481
    %v624 = vpop.permute.xlu0 %623
    %627 = vset.pattern.permute.xlu0 0
    %628 = vperm.xlu0 %627, %v482
    %v629 = vpop.permute.xlu0 %628
    %632 = vset.pattern.permute.xlu0 0
    %633 = vperm.xlu0 %632, %v483
    %v634 = vpop.permute.xlu0 %633
    %637 = vset.pattern.permute.xlu0 0
    %638 = vperm.xlu0 %637, %v484
    %v639 = vpop.permute.xlu0 %638
    %642 = vset.pattern.permute.xlu0 0
    %643 = vperm.xlu0 %642, %v485
    %v644 = vpop.permute.xlu0 %643
    %v646 = vadd.f32 %v422, %v489
    %v647 = vadd.f32 %v423, %v494
    %v648 = vadd.f32 %v424, %v499
    %v649 = vadd.f32 %v425, %v504
    %v650 = vadd.f32 %v426, %v509
    %v651 = vadd.f32 %v427, %v514
    %v652 = vadd.f32 %v428, %v519
    %v653 = vadd.f32 %v429, %v524
    %v654 = vadd.f32 %v430, %v529
    %v655 = vadd.f32 %v431, %v534
    %v656 = vadd.f32 %v432, %v539
    %v657 = vadd.f32 %v433, %v544
    %v658 = vadd.f32 %v434, %v549
    %v659 = vadd.f32 %v435, %v554
    %v660 = vadd.f32 %v436, %v559
    %v661 = vadd.f32 %v437, %v564
    %v662 = vadd.f32 %v438, %v569
    %v663 = vadd.f32 %v439, %v574
    %v664 = vadd.f32 %v440, %v579
    %v665 = vadd.f32 %v441, %v584
    %v666 = vadd.f32 %v442, %v589
    %v667 = vadd.f32 %v443, %v594
    %v668 = vadd.f32 %v444, %v599
    %v669 = vadd.f32 %v445, %v604
    %v670 = vadd.f32 %v446, %v609
    %v671 = vadd.f32 %v447, %v614
    %v672 = vadd.f32 %v448, %v619
    %v673 = vadd.f32 %v449, %v624
    %v674 = vadd.f32 %v450, %v629
    %v675 = vadd.f32 %v451, %v634
    %v676 = vadd.f32 %v452, %v639
    %v677 = vadd.f32 %v453, %v644
    %v678 = vld [vmem:[%s3] sm:$0xff]
    %v679 = vld [vmem:[%s3 + $0x8] sm:$0xff]
    %v680 = vld [vmem:[%s3 + $0x10] sm:$0xff]
    %v681 = vld [vmem:[%s3 + $0x18] sm:$0xff]
    %v682 = vld [vmem:[%s3 + $0x20] sm:$0xff]
    %v683 = vld [vmem:[%s3 + $0x28] sm:$0xff]
    %v684 = vld [vmem:[%s3 + $0x30] sm:$0xff]
    %v685 = vld [vmem:[%s3 + $0x38] sm:$0xff]
    %v686 = vld [vmem:[%s3 + $0x40] sm:$0xff]
    %v687 = vld [vmem:[%s3 + $0x48] sm:$0xff]
    %v688 = vld [vmem:[%s3 + $0x50] sm:$0xff]
    %v689 = vld [vmem:[%s3 + $0x58] sm:$0xff]
    %v690 = vld [vmem:[%s3 + $0x60] sm:$0xff]
    %v691 = vld [vmem:[%s3 + $0x68] sm:$0xff]
    %v692 = vld [vmem:[%s3 + $0x70] sm:$0xff]
    %v693 = vld [vmem:[%s3 + $0x78] sm:$0xff]
    %v694 = vld [vmem:[%s3 + $0x80] sm:$0xff]
    %v695 = vld [vmem:[%s3 + $0x88] sm:$0xff]
    %v696 = vld [vmem:[%s3 + $0x90] sm:$0xff]
    %v697 = vld [vmem:[%s3 + $0x98] sm:$0xff]
    %v698 = vld [vmem:[%s3 + $0xa0] sm:$0xff]
    %v699 = vld [vmem:[%s3 + $0xa8] sm:$0xff]
    %v700 = vld [vmem:[%s3 + $0xb0] sm:$0xff]
    %v701 = vld [vmem:[%s3 + $0xb8] sm:$0xff]
    %v702 = vld [vmem:[%s3 + $0xc0] sm:$0xff]
    %v703 = vld [vmem:[%s3 + $0xc8] sm:$0xff]
    %v704 = vld [vmem:[%s3 + $0xd0] sm:$0xff]
    %v705 = vld [vmem:[%s3 + $0xd8] sm:$0xff]
    %v706 = vld [vmem:[%s3 + $0xe0] sm:$0xff]
    %v707 = vld [vmem:[%s3 + $0xe8] sm:$0xff]
    %v708 = vld [vmem:[%s3 + $0xf0] sm:$0xff]
    %v709 = vld [vmem:[%s3 + $0xf8] sm:$0xff]
    %v710 = vld [vmem:[%s4] sm:$0xff]
    %v711 = vld [vmem:[%s4 + $0x8] sm:$0xff]
    %v712 = vld [vmem:[%s4 + $0x10] sm:$0xff]
    %v713 = vld [vmem:[%s4 + $0x18] sm:$0xff]
    %v714 = vld [vmem:[%s4 + $0x20] sm:$0xff]
    %v715 = vld [vmem:[%s4 + $0x28] sm:$0xff]
    %v716 = vld [vmem:[%s4 + $0x30] sm:$0xff]
    %v717 = vld [vmem:[%s4 + $0x38] sm:$0xff]
    %v718 = vld [vmem:[%s4 + $0x40] sm:$0xff]
    %v719 = vld [vmem:[%s4 + $0x48] sm:$0xff]
    %v720 = vld [vmem:[%s4 + $0x50] sm:$0xff]
    %v721 = vld [vmem:[%s4 + $0x58] sm:$0xff]
    %v722 = vld [vmem:[%s4 + $0x60] sm:$0xff]
    %v723 = vld [vmem:[%s4 + $0x68] sm:$0xff]
    %v724 = vld [vmem:[%s4 + $0x70] sm:$0xff]
    %v725 = vld [vmem:[%s4 + $0x78] sm:$0xff]
    %727 = vset.pattern.permute.xlu0 0
    %728 = vperm.xlu0 %727, %v710
    %v729 = vpop.permute.xlu0 %728
    %732 = vset.pattern.permute.xlu0 0
    %733 = vperm.xlu0 %732, %v711
    %v734 = vpop.permute.xlu0 %733
    %737 = vset.pattern.permute.xlu0 0
    %738 = vperm.xlu0 %737, %v712
    %v739 = vpop.permute.xlu0 %738
    %742 = vset.pattern.permute.xlu0 0
    %743 = vperm.xlu0 %742, %v713
    %v744 = vpop.permute.xlu0 %743
    %747 = vset.pattern.permute.xlu0 0
    %748 = vperm.xlu0 %747, %v714
    %v749 = vpop.permute.xlu0 %748
    %752 = vset.pattern.permute.xlu0 0
    %753 = vperm.xlu0 %752, %v715
    %v754 = vpop.permute.xlu0 %753
    %757 = vset.pattern.permute.xlu0 0
    %758 = vperm.xlu0 %757, %v716
    %v759 = vpop.permute.xlu0 %758
    %762 = vset.pattern.permute.xlu0 0
    %763 = vperm.xlu0 %762, %v717
    %v764 = vpop.permute.xlu0 %763
    %767 = vset.pattern.permute.xlu0 0
    %768 = vperm.xlu0 %767, %v718
    %v769 = vpop.permute.xlu0 %768
    %772 = vset.pattern.permute.xlu0 0
    %773 = vperm.xlu0 %772, %v719
    %v774 = vpop.permute.xlu0 %773
    %777 = vset.pattern.permute.xlu0 0
    %778 = vperm.xlu0 %777, %v720
    %v779 = vpop.permute.xlu0 %778
    %782 = vset.pattern.permute.xlu0 0
    %783 = vperm.xlu0 %782, %v721
    %v784 = vpop.permute.xlu0 %783
    %787 = vset.pattern.permute.xlu0 0
    %788 = vperm.xlu0 %787, %v722
    %v789 = vpop.permute.xlu0 %788
    %792 = vset.pattern.permute.xlu0 0
    %793 = vperm.xlu0 %792, %v723
    %v794 = vpop.permute.xlu0 %793
    %797 = vset.pattern.permute.xlu0 0
    %798 = vperm.xlu0 %797, %v724
    %v799 = vpop.permute.xlu0 %798
    %802 = vset.pattern.permute.xlu0 0
    %803 = vperm.xlu0 %802, %v725
    %v804 = vpop.permute.xlu0 %803
    %806 = vmatprep.subr.mxu0 0.0
    %807 = vmatpush1.msra.mxu0 %v646
    %808 = vmatprep.subr.mxu0 0.0
    %809 = vmatpush1.msra.mxu0 %v647
    %810 = vmatprep.subr.mxu0 0.0
    %811 = vmatpush1.msra.mxu0 %v648
    %812 = vmatprep.subr.mxu0 0.0
    %813 = vmatpush1.msra.mxu0 %v649
    %814 = vmatprep.subr.mxu0 0.0
    %815 = vmatpush1.msra.mxu0 %v650
    %816 = vmatprep.subr.mxu0 0.0
    %817 = vmatpush1.msra.mxu0 %v651
    %818 = vmatprep.subr.mxu0 0.0
    %819 = vmatpush1.msra.mxu0 %v652
    %820 = vmatprep.subr.mxu0 0.0
    %821 = vmatpush1.msra.mxu0 %v653
    %822 = vmatprep.subr.mxu0 0.0
    %823 = vmatpush1.msra.mxu0 %v654
    %824 = vmatprep.subr.mxu0 0.0
    %825 = vmatpush1.msra.mxu0 %v655
    %826 = vmatprep.subr.mxu0 0.0
    %827 = vmatpush1.msra.mxu0 %v656
    %828 = vmatprep.subr.mxu0 0.0
    %829 = vmatpush1.msra.mxu0 %v657
    %830 = vmatprep.subr.mxu0 0.0
    %831 = vmatpush1.msra.mxu0 %v658
    %832 = vmatprep.subr.mxu0 0.0
    %833 = vmatpush1.msra.mxu0 %v659
    %834 = vmatprep.subr.mxu0 0.0
    %835 = vmatpush1.msra.mxu0 %v660
    %836 = vmatprep.subr.mxu0 0.0
    %837 = vmatpush1.msra.mxu0 %v661
    %838 = vmatprep.subr.mxu0 0.0
    %839 = vmatpush1.msra.mxu0 %v662
    %840 = vmatprep.subr.mxu0 0.0
    %841 = vmatpush1.msra.mxu0 %v663
    %842 = vmatprep.subr.mxu0 0.0
    %843 = vmatpush1.msra.mxu0 %v664
    %844 = vmatprep.subr.mxu0 0.0
    %845 = vmatpush1.msra.mxu0 %v665
    %846 = vmatprep.subr.mxu0 0.0
    %847 = vmatpush1.msra.mxu0 %v666
    %848 = vmatprep.subr.mxu0 0.0
    %849 = vmatpush1.msra.mxu0 %v667
    %850 = vmatprep.subr.mxu0 0.0
    %851 = vmatpush1.msra.mxu0 %v668
    %852 = vmatprep.subr.mxu0 0.0
    %853 = vmatpush1.msra.mxu0 %v669
    %854 = vmatprep.subr.mxu0 0.0
    %855 = vmatpush1.msra.mxu0 %v670
    %856 = vmatprep.subr.mxu0 0.0
    %857 = vmatpush1.msra.mxu0 %v671
    %858 = vmatprep.subr.mxu0 0.0
    %859 = vmatpush1.msra.mxu0 %v672
    %860 = vmatprep.subr.mxu0 0.0
    %861 = vmatpush1.msra.mxu0 %v673
    %862 = vmatprep.subr.mxu0 0.0
    %863 = vmatpush1.msra.mxu0 %v674
    %864 = vmatprep.subr.mxu0 0.0
    %865 = vmatpush1.msra.mxu0 %v675
    %866 = vmatprep.subr.mxu0 0.0
    %867 = vmatpush1.msra.mxu0 %v676
    %868 = vmatprep.subr.mxu0 0.0
    %869 = vmatpush1.msra.mxu0 %v677
    %870 = vmatprep.mubr.f32.mxu0 %v679
    %871 = vmatmul.mubr.f32.gmra.mrb[0].mxu0 %v678
    %v872 = vpop.f32.mrb[0].mxu0
    %v873 = vadd.f32 %v729, %v872
    %v874 = vpop.f32.mrb[0].mxu0
    %875 = vmatprep.mubr.f32.mxu0 %v681
    %876 = vmatmul.mubr.f32.gmra.mrb[0].mxu0 %v680
    %v877 = vpop.f32.mrb[0].mxu0
    %v878 = vadd.f32 %v734, %v877
    %v879 = vpop.f32.mrb[0].mxu0
    %880 = vmatprep.mubr.f32.mxu0 %v683
    %881 = vmatmul.mubr.f32.gmra.mrb[0].mxu0 %v682
    %v882 = vpop.f32.mrb[0].mxu0
    %v883 = vadd.f32 %v739, %v882
    %v884 = vpop.f32.mrb[0].mxu0
    %885 = vmatprep.mubr.f32.mxu0 %v685
    %886 = vmatmul.mubr.f32.gmra.mrb[0].mxu0 %v684
    %v887 = vpop.f32.mrb[0].mxu0
    %v888 = vadd.f32 %v744, %v887
    %v889 = vpop.f32.mrb[0].mxu0
    %890 = vmatprep.mubr.f32.mxu0 %v687
    %891 = vmatmul.mubr.f32.gmra.mrb[0].mxu0 %v686
    %v892 = vpop.f32.mrb[0].mxu0
    %v893 = vadd.f32 %v749, %v892
    %v894 = vpop.f32.mrb[0].mxu0
    %895 = vmatprep.mubr.f32.mxu0 %v689
    %896 = vmatmul.mubr.f32.gmra.mrb[0].mxu0 %v688
    %v897 = vpop.f32.mrb[0].mxu0
    %v898 = vadd.f32 %v754, %v897
    %v899 = vpop.f32.mrb[0].mxu0
    %900 = vmatprep.mubr.f32.mxu0 %v691
    %901 = vmatmul.mubr.f32.gmra.mrb[0].mxu0 %v690
    %v902 = vpop.f32.mrb[0].mxu0
    %v903 = vadd.f32 %v759, %v902
    %v904 = vpop.f32.mrb[0].mxu0
    %905 = vmatprep.mubr.f32.mxu0 %v693
    %906 = vmatmul.mubr.f32.gmra.mrb[0].mxu0 %v692
    %v907 = vpop.f32.mrb[0].mxu0
    %v908 = vadd.f32 %v764, %v907
    %v909 = vpop.f32.mrb[0].mxu0
    %910 = vmatprep.mubr.f32.mxu0 %v695
    %911 = vmatmul.mubr.f32.gmra.mrb[0].mxu0 %v694
    %v912 = vpop.f32.mrb[0].mxu0
    %v913 = vadd.f32 %v769, %v912
    %v914 = vpop.f32.mrb[0].mxu0
    %915 = vmatprep.mubr.f32.mxu0 %v697
    %916 = vmatmul.mubr.f32.gmra.mrb[0].mxu0 %v696
    %v917 = vpop.f32.mrb[0].mxu0
    %v918 = vadd.f32 %v774, %v917
    %v919 = vpop.f32.mrb[0].mxu0
    %920 = vmatprep.mubr.f32.mxu0 %v699
    %921 = vmatmul.mubr.f32.gmra.mrb[0].mxu0 %v698
    %v922 = vpop.f32.mrb[0].mxu0
    %v923 = vadd.f32 %v779, %v922
    %v924 = vpop.f32.mrb[0].mxu0
    %925 = vmatprep.mubr.f32.mxu0 %v701
    %926 = vmatmul.mubr.f32.gmra.mrb[0].mxu0 %v700
    %v927 = vpop.f32.mrb[0].mxu0
    %v928 = vadd.f32 %v784, %v927
    %v929 = vpop.f32.mrb[0].mxu0
    %930 = vmatprep.mubr.f32.mxu0 %v703
    %931 = vmatmul.mubr.f32.gmra.mrb[0].mxu0 %v702
    %v932 = vpop.f32.mrb[0].mxu0
    %v933 = vadd.f32 %v789, %v932
    %v934 = vpop.f32.mrb[0].mxu0
    %935 = vmatprep.mubr.f32.mxu0 %v705
    %936 = vmatmul.mubr.f32.gmra.mrb[0].mxu0 %v704
    %v937 = vpop.f32.mrb[0].mxu0
    %v938 = vadd.f32 %v794, %v937
    %v939 = vpop.f32.mrb[0].mxu0
    %940 = vmatprep.mubr.f32.mxu0 %v707
    %941 = vmatmul.mubr.f32.gmra.mrb[0].mxu0 %v706
    %v942 = vpop.f32.mrb[0].mxu0
    %v943 = vadd.f32 %v799, %v942
    %v944 = vpop.f32.mrb[0].mxu0
    %945 = vmatprep.mubr.f32.mxu0 %v709
    %946 = vmatmul.mubr.f32.gmra.mrb[0].mxu0 %v708
    %v947 = vpop.f32.mrb[0].mxu0
    %v948 = vadd.f32 %v804, %v947
    %v949 = vpop.f32.mrb[0].mxu0
    %950 = vdwg.mxu0
    %v951 = vld [vmem:[%s5] sm:$0x1]
    %v952 = vld [vmem:[#allocation2] sm:$0x1]
    %954 = vset.pattern.permute.xlu0 0
    %955 = vperm.xlu0 %954, %v952
    %v956 = vpop.permute.xlu0 %955
    %v958 = vlaneseq
    %v959 = vshrl.u32 %v958, 7
    %v960 = vsub.s32 0, %v959
    %v961 = vrot.slane %v956, %v960
    %962 = vmatprep.subr.mxu0 0.0
    %963 = vmatpush1.msra.mxu0 %v873
    %964 = vmatprep.subr.mxu0 0.0
    %965 = vmatpush1.msra.mxu0 %v878
    %966 = vmatprep.subr.mxu0 0.0
    %967 = vmatpush1.msra.mxu0 %v883
    %968 = vmatprep.subr.mxu0 0.0
    %969 = vmatpush1.msra.mxu0 %v888
    %970 = vmatprep.subr.mxu0 0.0
    %971 = vmatpush1.msra.mxu0 %v893
    %972 = vmatprep.subr.mxu0 0.0
    %973 = vmatpush1.msra.mxu0 %v898
    %974 = vmatprep.subr.mxu0 0.0
    %975 = vmatpush1.msra.mxu0 %v903
    %976 = vmatprep.subr.mxu0 0.0
    %977 = vmatpush1.msra.mxu0 %v908
    %978 = vmatprep.subr.mxu0 0.0
    %979 = vmatpush1.msra.mxu0 %v913
    %980 = vmatprep.subr.mxu0 0.0
    %981 = vmatpush1.msra.mxu0 %v918
    %982 = vmatprep.subr.mxu0 0.0
    %983 = vmatpush1.msra.mxu0 %v923
    %984 = vmatprep.subr.mxu0 0.0
    %985 = vmatpush1.msra.mxu0 %v928
    %986 = vmatprep.subr.mxu0 0.0
    %987 = vmatpush1.msra.mxu0 %v933
    %988 = vmatprep.subr.mxu0 0.0
    %989 = vmatpush1.msra.mxu0 %v938
    %990 = vmatprep.subr.mxu0 0.0
    %991 = vmatpush1.msra.mxu0 %v943
    %992 = vmatprep.subr.mxu0 0.0
    %993 = vmatpush1.msra.mxu0 %v948
    %994 = vmatprep.subr.mxu0 0.0
    %995 = vmatpush1.msra.mxu0 0.0
    %996 = vmatprep.subr.mxu0 0.0
    %997 = vmatpush1.msra.mxu0 0.0
    %998 = vmatprep.subr.mxu0 0.0
    %999 = vmatpush1.msra.mxu0 0.0
    %1000 = vmatprep.subr.mxu0 0.0
    %1001 = vmatpush1.msra.mxu0 0.0
    %1002 = vmatprep.subr.mxu0 0.0
    %1003 = vmatpush1.msra.mxu0 0.0
    %1004 = vmatprep.subr.mxu0 0.0
    %1005 = vmatpush1.msra.mxu0 0.0
    %1006 = vmatprep.subr.mxu0 0.0
    %1007 = vmatpush1.msra.mxu0 0.0
    %1008 = vmatprep.subr.mxu0 0.0
    %1009 = vmatpush1.msra.mxu0 0.0
    %1010 = vmatprep.subr.mxu0 0.0
    %1011 = vmatpush1.msra.mxu0 0.0
    %1012 = vmatprep.subr.mxu0 0.0
    %1013 = vmatpush1.msra.mxu0 0.0
    %1014 = vmatprep.subr.mxu0 0.0
    %1015 = vmatpush1.msra.mxu0 0.0
    %1016 = vmatprep.subr.mxu0 0.0
    %1017 = vmatpush1.msra.mxu0 0.0
    %1018 = vmatprep.subr.mxu0 0.0
    %1019 = vmatpush1.msra.mxu0 0.0
    %1020 = vmatprep.subr.mxu0 0.0
    %1021 = vmatpush1.msra.mxu0 0.0
    %1022 = vmatprep.subr.mxu0 0.0
    %1023 = vmatpush1.msra.mxu0 0.0
    %1024 = vmatprep.subr.mxu0 0.0
    %1025 = vmatpush1.msra.mxu0 0.0
    %1026 = vmatprep.mubr.f32.mxu0 0.0
    %1027 = vmatmul.mubr.f32.gmra.mrb[0].mxu0 %v951
    %v1028 = vpop.f32.mrb[0].mxu0
    %v1029 = vadd.f32 %v961, %v1028
    %v1030 = vpop.f32.mrb[0].mxu0
    %1031 = vdwg.mxu0
    %1032 = vst [vmem:[#allocation3] sm:$0x1] %v1029
    // Predicated region
    $region30: #{tpu_custom_call.1} parent=1 // pred_check
      _
    $region31: #{tpu_custom_call.1} parent=1 // pred_check_branch
      %1034 = sbr.rel (0) target = $region33
    $region32: #{tpu_custom_call.1} parent=1 // pred_region
      %s1036 = ssub.s32 16, 16
      %1037 = vsyncadd [#allocation4], %s1036
      %s1039 = sshll.u32 [#allocation3], 4
      %s1040 = int_to_ptr.vmem [resolvable:$true] %s1039
      %1042 = dma.vmem_to_hbm [thread:$0]  %s1040, 16, %s7, [#allocation4]
    $region33: #{tpu_custom_call.1} parent=1 // pred_fallthru
      _
    // Predicated region
    $region34: #{tpu_custom_call.1} parent=1 // pred_check
      _
    $region35: #{tpu_custom_call.1} parent=1 // pred_check_branch
      %1044 = sbr.rel (0) target = $region37
    $region36: #{tpu_custom_call.1} parent=1 // pred_region
      %1045 = dma.done [#allocation4], 16
    $region37: #{tpu_custom_call.1} parent=1 // pred_fallthru
      _
    %1046 = vsyncpa [#allocation4], 1

</llo_original>
